<compile_context>
chip_gen: v7x
topology: tpu7x:2x2x1
jax: 0.10.0
libtpu: 0.0.40
codegen_flags: <defaults>
</compile_context>

<pallas_src>
import jax
import jax.numpy as jnp
from jax import lax
from jax.experimental import pallas as pl
from jax.experimental.pallas import tpu as pltpu


def _td_mlp_kernel(x_ref,
                   w1_ref, b1_ref,
                   w2_ref, b2_ref,
                   w3_ref, b3_ref,
                   w4_ref, b4_ref,
                   o_ref):
    """Fused MLP tile: x_ref (TB, 14) -> o_ref (1, TB), batch on lanes."""
    x = x_ref[...]                                                   # (TB, 14)
    # Layer 1: contract feature dims of w1 (64, 14) with x (TB, 14) on the MXU
    # (same dot_general pattern as q @ k^T); result is lane-dense (64, TB).
    h = lax.dot_general(w1_ref[...], x,
                        dimension_numbers=(((1,), (1,)), ((), ())),
                        preferred_element_type=jnp.float32)          # (64, TB)
    h = jnp.tanh(h + b1_ref[...])
    h = jnp.tanh(jnp.dot(w2_ref[...], h,
                         preferred_element_type=jnp.float32) + b2_ref[...])   # (64, TB)
    h = jnp.tanh(jnp.dot(w3_ref[...], h,
                         preferred_element_type=jnp.float32) + b3_ref[...])   # (32, TB)
    # Final layer: output dim is 1 -> skip the MXU; VPU multiply + sublane
    # (XLU) reduction runs in otherwise-idle slots.
    w4 = w4_ref[...]                                                 # (1, 32)
    y = jnp.sum(w4.T * h, axis=0, keepdims=True) + b4_ref[...]       # (1, TB)
    o_ref[...] = y


_WEIGHT_PARAMS = 64 * 14 + 64 + 64 * 64 + 64 + 32 * 64 + 32 + 32 + 1  # 7233
_FLOPS_PER_ROW = 2 * (14 * 64 + 64 * 64 + 64 * 32 + 32)               # 14144
_TANH_PER_ROW = 64 + 64 + 32                                           # 160

_LANE = 128
_TB_CAP = 2048   # lane-tile cap (perf review: sweep 1024/2048/4096)


def _round_up(n, m):
    return ((n + m - 1) // m) * m


@jax.jit
def td_network_forward(x, params):
    """Pallas forward matching TDNetwork.forward.

    x: float32 array of shape (B, 14) or (14,).
    params: dict with w1..w4 stored (out_features, in_features) and b1..b4
            stored (out_features, 1) or (out_features,) (nn.Linear layout).
    Returns squeeze() of the (B, 1) result, like the torch module.
    """
    x = jnp.asarray(x, dtype=jnp.float32)
    if x.ndim == 1:
        x = x[None, :]
    b = x.shape[0]

    # Lane-tile selection: multiples of 128 (batch on lanes), big cap to
    # amortize per-step overhead, and >= 2 grid steps when B > 128 so the
    # parallel axis can shard across both TensorCores on v7x.
    lane_groups = _round_up(b, _LANE) // _LANE
    if lane_groups <= 1:
        tb = _LANE
    else:
        n_steps = max(2, pl.cdiv(lane_groups, _TB_CAP // _LANE))
        tb = pl.cdiv(lane_groups, n_steps) * _LANE
    grid_n = pl.cdiv(b, tb)
    bp = grid_n * tb

    # x stays in its native (B, 14) layout (no transpose); pad batch rows up
    # to the tile multiple only when needed.  Padded rows compute tanh(bias)
    # chains and are sliced off below.
    if bp != b:
        x = jnp.pad(x, ((0, bp - b), (0, 0)))

    # Biases as (out, 1) columns so they broadcast across the batch lanes.
    b1 = params["b1"].reshape(-1, 1)
    b2 = params["b2"].reshape(-1, 1)
    b3 = params["b3"].reshape(-1, 1)
    b4 = params["b4"].reshape(-1, 1)

    def _resident(shape):
        # Constant index_map -> block DMA'd once, resident across grid steps.
        return pl.BlockSpec(shape, lambda i: (0, 0))

    out = pl.pallas_call(
        _td_mlp_kernel,
        out_shape=jax.ShapeDtypeStruct((1, bp), jnp.float32),
        grid=(grid_n,),
        in_specs=[
            pl.BlockSpec((tb, 14), lambda i: (i, 0)),   # x tiles, pipelined
            _resident((64, 14)), _resident((64, 1)),
            _resident((64, 64)), _resident((64, 1)),
            _resident((32, 64)), _resident((32, 1)),
            _resident((1, 32)), _resident((1, 1)),
        ],
        out_specs=pl.BlockSpec((1, tb), lambda i: (0, i)),   # lane-dense store
        compiler_params=pltpu.CompilerParams(
            dimension_semantics=("parallel",)),
        cost_estimate=pl.CostEstimate(
            flops=_FLOPS_PER_ROW * bp,
            transcendentals=_TANH_PER_ROW * bp,
            bytes_accessed=4 * bp * (14 + 1) + 4 * _WEIGHT_PARAMS),
    )(x,
      params["w1"], b1,
      params["w2"], b2,
      params["w3"], b3,
      params["w4"], b4)

    y = out[0, :b]          # (B,)
    return jnp.squeeze(y)   # scalar when B == 1, like torch .squeeze()


def init_params(key):
    """Init mimicking nn.Linear's U(-1/sqrt(fan_in), 1/sqrt(fan_in)).

    Weights stored (out_features, in_features); biases stored (out_features, 1).
    """
    dims = [(14, 64), (64, 64), (64, 32), (32, 1)]
    params = {}
    keys = jax.random.split(key, 2 * len(dims))
    for i, (fan_in, fan_out) in enumerate(dims):
        bound = 1.0 / jnp.sqrt(float(fan_in))
        w = jax.random.uniform(keys[2 * i], (fan_out, fan_in),
                               minval=-bound, maxval=bound, dtype=jnp.float32)
        bias = jax.random.uniform(keys[2 * i + 1], (fan_out, 1),
                                  minval=-bound, maxval=bound, dtype=jnp.float32)
        params[f"w{i + 1}"] = w
        params[f"b{i + 1}"] = bias
    return params


def _reference_forward(x, params):
    x = jnp.asarray(x, dtype=jnp.float32)
    if x.ndim == 1:
        x = x[None, :]
    hp = jax.lax.Precision.HIGHEST
    h = jnp.tanh(jnp.dot(x, params["w1"].T, precision=hp) + params["b1"].T)
    h = jnp.tanh(jnp.dot(h, params["w2"].T, precision=hp) + params["b2"].T)
    h = jnp.tanh(jnp.dot(h, params["w3"].T, precision=hp) + params["b3"].T)
    y = jnp.dot(h, params["w4"].T, precision=hp) + params["b4"].T
    return jnp.squeeze(y)


if __name__ == "__main__":
    key = jax.random.PRNGKey(0)
    pkey, xkey, x2key = jax.random.split(key, 3)
    params = init_params(pkey)

    # Small batched input (B=8, features=14), matching TDNetwork.forward.
    x = jax.random.uniform(xkey, (8, 14), dtype=jnp.float32)
    y = jax.block_until_ready(td_network_forward(x, params))
    y_ref = _reference_forward(x, params)
    assert y.shape == (8,), y.shape
    assert jnp.allclose(y, y_ref, atol=1e-4, rtol=1e-4), (y, y_ref)

    # 1-D input path (squeezes to a scalar).
    x1 = jax.random.uniform(jax.random.PRNGKey(1), (14,), dtype=jnp.float32)
    y1 = jax.block_until_ready(td_network_forward(x1, params))
    assert y1.shape == (), y1.shape
    assert jnp.allclose(y1, _reference_forward(x1, params), atol=1e-4, rtol=1e-4)

    # Multi-tile batch exercising the >=2-step grid + row-padding path
    # (B=513 -> tb=384, grid=(2,), padded to 768 rows).
    x2 = jax.random.uniform(x2key, (513, 14), dtype=jnp.float32)
    y2 = jax.block_until_ready(td_network_forward(x2, params))
    assert y2.shape == (513,), y2.shape
    assert jnp.allclose(y2, _reference_forward(x2, params), atol=1e-4, rtol=1e-4)

    print("KERNEL_OK")
</pallas_src>

<mosaic_0001>
module attributes {stable_mosaic.version = 11 : i64} {
  func.func @_td_mlp_kernel(%arg0: i32, %arg1: memref<128x14xf32, #tpu.memory_space<vmem>>, %arg2: memref<64x14xf32, #tpu.memory_space<vmem>>, %arg3: memref<64x1xf32, #tpu.memory_space<vmem>>, %arg4: memref<64x64xf32, #tpu.memory_space<vmem>>, %arg5: memref<64x1xf32, #tpu.memory_space<vmem>>, %arg6: memref<32x64xf32, #tpu.memory_space<vmem>>, %arg7: memref<32x1xf32, #tpu.memory_space<vmem>>, %arg8: memref<1x32xf32, #tpu.memory_space<vmem>>, %arg9: memref<1x1xf32, #tpu.memory_space<vmem>>, %arg10: memref<1x128xf32, #tpu.memory_space<vmem>>) attributes {dimension_semantics = [#tpu.dimension_semantics<parallel>], iteration_bounds = array<i64: 1>, scalar_prefetch = 0 : i64, scratch_operands = 0 : i64, tpu.core_type = #tpu.core_type<tc>, window_params = [{transform_indices = @transform_0, window_bounds = array<i64: 128, 14>}, {pipeline_mode = #tpu.pipeline_mode<synchronous>, transform_indices = @transform_1, window_bounds = array<i64: 64, 14>}, {pipeline_mode = #tpu.pipeline_mode<synchronous>, transform_indices = @transform_2, window_bounds = array<i64: 64, 1>}, {pipeline_mode = #tpu.pipeline_mode<synchronous>, transform_indices = @transform_3, window_bounds = array<i64: 64, 64>}, {pipeline_mode = #tpu.pipeline_mode<synchronous>, transform_indices = @transform_4, window_bounds = array<i64: 64, 1>}, {pipeline_mode = #tpu.pipeline_mode<synchronous>, transform_indices = @transform_5, window_bounds = array<i64: 32, 64>}, {pipeline_mode = #tpu.pipeline_mode<synchronous>, transform_indices = @transform_6, window_bounds = array<i64: 32, 1>}, {pipeline_mode = #tpu.pipeline_mode<synchronous>, transform_indices = @transform_7, window_bounds = array<i64: 1, 32>}, {pipeline_mode = #tpu.pipeline_mode<synchronous>, transform_indices = @transform_8, window_bounds = array<i64: 1, 1>}, {transform_indices = @transform_9, window_bounds = array<i64: 1, 128>}]} {
    %c0 = arith.constant 0 : index
    %c0_0 = arith.constant 0 : index
    %0 = vector.load %arg1[%c0, %c0_0] : memref<128x14xf32, #tpu.memory_space<vmem>>, vector<128x14xf32>
    %c0_1 = arith.constant 0 : index
    %c0_2 = arith.constant 0 : index
    %1 = vector.load %arg2[%c0_1, %c0_2] : memref<64x14xf32, #tpu.memory_space<vmem>>, vector<64x14xf32>
    %cst = arith.constant dense<0.000000e+00> : vector<64x128xf32>
    %2 = tpu.matmul %1, %0, %cst {dimension_numbers = #tpu.dot_dimension_numbers<[1], [1], [0], [0], [0, 0, 1, 0], [], []>} : vector<64x14xf32>, vector<128x14xf32>, vector<64x128xf32> -> vector<64x128xf32>
    %c0_3 = arith.constant 0 : index
    %c0_4 = arith.constant 0 : index
    %3 = vector.load %arg3[%c0_3, %c0_4] : memref<64x1xf32, #tpu.memory_space<vmem>>, vector<64x1xf32>
    %4 = vector.broadcast %3 : vector<64x1xf32> to vector<64x128xf32>
    %5 = arith.addf %2, %4 : vector<64x128xf32>
    %6 = math.tanh %5 : vector<64x128xf32>
    %c0_5 = arith.constant 0 : index
    %c0_6 = arith.constant 0 : index
    %7 = vector.load %arg4[%c0_5, %c0_6] : memref<64x64xf32, #tpu.memory_space<vmem>>, vector<64x64xf32>
    %cst_7 = arith.constant dense<0.000000e+00> : vector<64x128xf32>
    %8 = tpu.matmul %7, %6, %cst_7 {dimension_numbers = #tpu.dot_dimension_numbers<[1], [0], [0], [1], [0, 0, 1, 1], [], []>} : vector<64x64xf32>, vector<64x128xf32>, vector<64x128xf32> -> vector<64x128xf32>
    %c0_8 = arith.constant 0 : index
    %c0_9 = arith.constant 0 : index
    %9 = vector.load %arg5[%c0_8, %c0_9] : memref<64x1xf32, #tpu.memory_space<vmem>>, vector<64x1xf32>
    %10 = vector.broadcast %9 : vector<64x1xf32> to vector<64x128xf32>
    %11 = arith.addf %8, %10 : vector<64x128xf32>
    %12 = math.tanh %11 : vector<64x128xf32>
    %c0_10 = arith.constant 0 : index
    %c0_11 = arith.constant 0 : index
    %13 = vector.load %arg6[%c0_10, %c0_11] : memref<32x64xf32, #tpu.memory_space<vmem>>, vector<32x64xf32>
    %cst_12 = arith.constant dense<0.000000e+00> : vector<32x128xf32>
    %14 = tpu.matmul %13, %12, %cst_12 {dimension_numbers = #tpu.dot_dimension_numbers<[1], [0], [0], [1], [0, 0, 1, 1], [], []>} : vector<32x64xf32>, vector<64x128xf32>, vector<32x128xf32> -> vector<32x128xf32>
    %c0_13 = arith.constant 0 : index
    %c0_14 = arith.constant 0 : index
    %15 = vector.load %arg7[%c0_13, %c0_14] : memref<32x1xf32, #tpu.memory_space<vmem>>, vector<32x1xf32>
    %16 = vector.broadcast %15 : vector<32x1xf32> to vector<32x128xf32>
    %17 = arith.addf %14, %16 : vector<32x128xf32>
    %18 = math.tanh %17 : vector<32x128xf32>
    %c0_15 = arith.constant 0 : index
    %c0_16 = arith.constant 0 : index
    %19 = vector.load %arg8[%c0_15, %c0_16] : memref<1x32xf32, #tpu.memory_space<vmem>>, vector<1x32xf32>
    %20 = tpu.transpose %19, [1, 0] : vector<1x32xf32> -> vector<32x1xf32>
    %21 = vector.broadcast %20 : vector<32x1xf32> to vector<32x128xf32>
    %22 = arith.mulf %21, %18 : vector<32x128xf32>
    %cst_17 = arith.constant dense<0.000000e+00> : vector<128xf32>
    %23 = vector.multi_reduction <add>, %22, %cst_17 [0] : vector<32x128xf32> to vector<128xf32>
    %24 = vector.shape_cast %23 : vector<128xf32> to vector<1x128xf32>
    %c0_18 = arith.constant 0 : index
    %c0_19 = arith.constant 0 : index
    %25 = vector.load %arg9[%c0_18, %c0_19] : memref<1x1xf32, #tpu.memory_space<vmem>>, vector<1x1xf32>
    %26 = vector.broadcast %25 : vector<1x1xf32> to vector<1x128xf32>
    %27 = arith.addf %24, %26 : vector<1x128xf32>
    %c0_20 = arith.constant 0 : index
    %c0_21 = arith.constant 0 : index
    %28 = vector.load %arg10[%c0_20, %c0_21] : memref<1x128xf32, #tpu.memory_space<vmem>>, vector<1x128xf32>
    tpu.vector_store %arg10[%c0_20, %c0_21], %27 {strides = array<i32>} : memref<1x128xf32, #tpu.memory_space<vmem>>, vector<1x128xf32>,
    return
  }
  func.func @transform_0(%arg0: i32) -> (i32, i32) {
    %c0_i32 = arith.constant 0 : i32
    %c0_i32_0 = arith.constant 0 : i32
    return %arg0, %c0_i32 : i32, i32
  }
  func.func @transform_1(%arg0: i32) -> (i32, i32) {
    %c0_i32 = arith.constant 0 : i32
    %c0_i32_0 = arith.constant 0 : i32
    %c0_i32_1 = arith.constant 0 : i32
    return %c0_i32, %c0_i32_0 : i32, i32
  }
  func.func @transform_2(%arg0: i32) -> (i32, i32) {
    %c0_i32 = arith.constant 0 : i32
    %c0_i32_0 = arith.constant 0 : i32
    %c0_i32_1 = arith.constant 0 : i32
    return %c0_i32, %c0_i32_0 : i32, i32
  }
  func.func @transform_3(%arg0: i32) -> (i32, i32) {
    %c0_i32 = arith.constant 0 : i32
    %c0_i32_0 = arith.constant 0 : i32
    %c0_i32_1 = arith.constant 0 : i32
    return %c0_i32, %c0_i32_0 : i32, i32
  }
  func.func @transform_4(%arg0: i32) -> (i32, i32) {
    %c0_i32 = arith.constant 0 : i32
    %c0_i32_0 = arith.constant 0 : i32
    %c0_i32_1 = arith.constant 0 : i32
    return %c0_i32, %c0_i32_0 : i32, i32
  }
  func.func @transform_5(%arg0: i32) -> (i32, i32) {
    %c0_i32 = arith.constant 0 : i32
    %c0_i32_0 = arith.constant 0 : i32
    %c0_i32_1 = arith.constant 0 : i32
    return %c0_i32, %c0_i32_0 : i32, i32
  }
  func.func @transform_6(%arg0: i32) -> (i32, i32) {
    %c0_i32 = arith.constant 0 : i32
    %c0_i32_0 = arith.constant 0 : i32
    %c0_i32_1 = arith.constant 0 : i32
    return %c0_i32, %c0_i32_0 : i32, i32
  }
  func.func @transform_7(%arg0: i32) -> (i32, i32) {
    %c0_i32 = arith.constant 0 : i32
    %c0_i32_0 = arith.constant 0 : i32
    %c0_i32_1 = arith.constant 0 : i32
    return %c0_i32, %c0_i32_0 : i32, i32
  }
  func.func @transform_8(%arg0: i32) -> (i32, i32) {
    %c0_i32 = arith.constant 0 : i32
    %c0_i32_0 = arith.constant 0 : i32
    %c0_i32_1 = arith.constant 0 : i32
    return %c0_i32, %c0_i32_0 : i32, i32
  }
  func.func @transform_9(%arg0: i32) -> (i32, i32) {
    %c0_i32 = arith.constant 0 : i32
    %c0_i32_0 = arith.constant 0 : i32
    return %c0_i32, %arg0 : i32, i32
  }
}

</mosaic_0001>

<llo_original>
// kernel: td_network_forward.1
$region0: #{td_network_forward.1}
  #allocation0 [shape = 'u32[]', space=smem, size = 0x4, offset = 0x4, fixed_abs, tag = 'smem constant byte address 0x4 - core index']
  #allocation1 [shape = 'u32[144,128]{1,0:T(1,128)}', space=vmem, size = 0x12000, scoped, tag = 'internal scratch']
  #allocation2 [shape = 'f32[1,1]{1,0:T(1,128)S(1)}', space=vmem, size = 0x200, scoped, tag = 'scoped memory for td_network_forward.1']
  %s0 = inlined_call_operand.vmem [shape: f32[128,14], index: 0, kind: input, shape index: {}]
  %s1 = inlined_call_operand.vmem [shape: f32[64,14], index: 1, kind: input, shape index: {}]
  %s2 = inlined_call_operand.vmem [shape: f32[64,1], index: 2, kind: input, shape index: {}]
  %s3 = inlined_call_operand.vmem [shape: f32[64,64], index: 3, kind: input, shape index: {}]
  %s4 = inlined_call_operand.vmem [shape: f32[64,1], index: 4, kind: input, shape index: {}]
  %s5 = inlined_call_operand.vmem [shape: f32[32,64], index: 5, kind: input, shape index: {}]
  %s6 = inlined_call_operand.vmem [shape: f32[32,1], index: 6, kind: input, shape index: {}]
  %s7 = inlined_call_operand.vmem [shape: f32[1,32], index: 7, kind: input, shape index: {}]
  %s8 = inlined_call_operand.<no memory space> [shape: f32[1,1], index: 8, kind: input, shape index: {}]
  %s9 = inlined_call_operand.vmem [shape: f32[1,128], index: 9, kind: output, shape index: {}]
  %s10 = sld [smem:[#allocation0]]
  $region46: #{td_network_forward.1} parent=0
    _
  %s12 = ssub.s32 1, %s10
  %s13 = scalar_select 0, %s12, %s10
  %v14 = vstv %s8
  %15 = vst [vmem:[#allocation2] sm:$0x1] %v14
  // Predicated region
  $region2: #{td_network_forward.1} parent=0 // pred_check
    _
  $region3: #{td_network_forward.1} parent=0 // pred_check_branch
    %17 = sbr.rel (0) target = $region5
  $region4: #{td_network_forward.1} parent=0 // pred_region
    _
  $region5: #{td_network_forward.1} parent=0 // pred_fallthru
    _
  // Predicated region
  $region6: #{td_network_forward.1} parent=0 // pred_check
    _
  $region7: #{td_network_forward.1} parent=0 // pred_check_branch
    %19 = sbr.rel (0) target = $region9
  $region8: #{td_network_forward.1} parent=0 // pred_region
    _
  $region9: #{td_network_forward.1} parent=0 // pred_fallthru
    _
  // Predicated region
  $region10: #{td_network_forward.1} parent=0 // pred_check
    _
  $region11: #{td_network_forward.1} parent=0 // pred_check_branch
    %21 = sbr.rel (0) target = $region13
  $region12: #{td_network_forward.1} parent=0 // pred_region
    _
  $region13: #{td_network_forward.1} parent=0 // pred_fallthru
    _
  // Predicated region
  $region14: #{td_network_forward.1} parent=0 // pred_check
    _
  $region15: #{td_network_forward.1} parent=0 // pred_check_branch
    %23 = sbr.rel (0) target = $region17
  $region16: #{td_network_forward.1} parent=0 // pred_region
    _
  $region17: #{td_network_forward.1} parent=0 // pred_fallthru
    _
  // Predicated region
  $region18: #{td_network_forward.1} parent=0 // pred_check
    _
  $region19: #{td_network_forward.1} parent=0 // pred_check_branch
    %25 = sbr.rel (0) target = $region21
  $region20: #{td_network_forward.1} parent=0 // pred_region
    _
  $region21: #{td_network_forward.1} parent=0 // pred_fallthru
    _
  // Predicated region
  $region22: #{td_network_forward.1} parent=0 // pred_check
    _
  $region23: #{td_network_forward.1} parent=0 // pred_check_branch
    %27 = sbr.rel (0) target = $region25
  $region24: #{td_network_forward.1} parent=0 // pred_region
    _
  $region25: #{td_network_forward.1} parent=0 // pred_fallthru
    _
  // Predicated region
  $region26: #{td_network_forward.1} parent=0 // pred_check
    _
  $region27: #{td_network_forward.1} parent=0 // pred_check_branch
    %29 = sbr.rel (0) target = $region29
  $region28: #{td_network_forward.1} parent=0 // pred_region
    _
  $region29: #{td_network_forward.1} parent=0 // pred_fallthru
    _
  // Predicated region
  $region30: #{td_network_forward.1} parent=0 // pred_check
    _
  $region31: #{td_network_forward.1} parent=0 // pred_check_branch
    %31 = sbr.rel (0) target = $region33
  $region32: #{td_network_forward.1} parent=0 // pred_region
    _
  $region33: #{td_network_forward.1} parent=0 // pred_fallthru
    _
  // Predicated region
  $region34: #{td_network_forward.1} parent=0 // pred_check
    _
  $region35: #{td_network_forward.1} parent=0 // pred_check_branch
    %33 = sbr.rel (0) target = $region37
  $region36: #{td_network_forward.1} parent=0 // pred_region
    _
  $region37: #{td_network_forward.1} parent=0 // pred_fallthru
    _
  %v34 = vld [vmem:[%s0] sm:$0xff]
  %v35 = vld [vmem:[%s0 + $0x8] sm:$0xff]
  %v36 = vld [vmem:[%s0 + $0x10] sm:$0xff]
  %v37 = vld [vmem:[%s0 + $0x18] sm:$0xff]
  %v38 = vld [vmem:[%s0 + $0x20] sm:$0xff]
  %v39 = vld [vmem:[%s0 + $0x28] sm:$0xff]
  %v40 = vld [vmem:[%s0 + $0x30] sm:$0xff]
  %v41 = vld [vmem:[%s0 + $0x38] sm:$0xff]
  %v42 = vld [vmem:[%s0 + $0x40] sm:$0xff]
  %v43 = vld [vmem:[%s0 + $0x48] sm:$0xff]
  %v44 = vld [vmem:[%s0 + $0x50] sm:$0xff]
  %v45 = vld [vmem:[%s0 + $0x58] sm:$0xff]
  %v46 = vld [vmem:[%s0 + $0x60] sm:$0xff]
  %v47 = vld [vmem:[%s0 + $0x68] sm:$0xff]
  %v48 = vld [vmem:[%s0 + $0x70] sm:$0xff]
  %v49 = vld [vmem:[%s0 + $0x78] sm:$0xff]
  %v50 = vld [vmem:[%s1] sm:$0xff]
  %v51 = vld [vmem:[%s1 + $0x8] sm:$0xff]
  %v52 = vld [vmem:[%s1 + $0x10] sm:$0xff]
  %v53 = vld [vmem:[%s1 + $0x18] sm:$0xff]
  %v54 = vld [vmem:[%s1 + $0x20] sm:$0xff]
  %v55 = vld [vmem:[%s1 + $0x28] sm:$0xff]
  %v56 = vld [vmem:[%s1 + $0x30] sm:$0xff]
  %v57 = vld [vmem:[%s1 + $0x38] sm:$0xff]
  %v58 = vld [vmem:[%s2] sm:$0xff]
  %v59 = vld [vmem:[%s2 + $0x8] sm:$0xff]
  %v60 = vld [vmem:[%s2 + $0x10] sm:$0xff]
  %v61 = vld [vmem:[%s2 + $0x18] sm:$0xff]
  %v62 = vld [vmem:[%s2 + $0x20] sm:$0xff]
  %v63 = vld [vmem:[%s2 + $0x28] sm:$0xff]
  %v64 = vld [vmem:[%s2 + $0x30] sm:$0xff]
  %v65 = vld [vmem:[%s2 + $0x38] sm:$0xff]
  %67 = vset.pattern.permute.xlu0 0
  %68 = vperm.xlu0 %67, %v58
  %v69 = vpop.permute.xlu0 %68
  %72 = vset.pattern.permute.xlu0 0
  %73 = vperm.xlu0 %72, %v59
  %v74 = vpop.permute.xlu0 %73
  %77 = vset.pattern.permute.xlu0 0
  %78 = vperm.xlu0 %77, %v60
  %v79 = vpop.permute.xlu0 %78
  %82 = vset.pattern.permute.xlu0 0
  %83 = vperm.xlu0 %82, %v61
  %v84 = vpop.permute.xlu0 %83
  %87 = vset.pattern.permute.xlu0 0
  %88 = vperm.xlu0 %87, %v62
  %v89 = vpop.permute.xlu0 %88
  %92 = vset.pattern.permute.xlu0 0
  %93 = vperm.xlu0 %92, %v63
  %v94 = vpop.permute.xlu0 %93
  %97 = vset.pattern.permute.xlu0 0
  %98 = vperm.xlu0 %97, %v64
  %v99 = vpop.permute.xlu0 %98
  %102 = vset.pattern.permute.xlu0 0
  %103 = vperm.xlu0 %102, %v65
  %v104 = vpop.permute.xlu0 %103
  %vm106 = vcmask 113664
  %v108 = vsel %vm106, %v50, 0
  %v111 = vsel %vm106, %v51, 0
  %v114 = vsel %vm106, %v52, 0
  %v117 = vsel %vm106, %v53, 0
  %v120 = vsel %vm106, %v54, 0
  %v123 = vsel %vm106, %v55, 0
  %v126 = vsel %vm106, %v56, 0
  %v129 = vsel %vm106, %v57, 0
  %v132 = vsel %vm106, %v34, 0
  %v135 = vsel %vm106, %v35, 0
  %v138 = vsel %vm106, %v36, 0
  %v141 = vsel %vm106, %v37, 0
  %v144 = vsel %vm106, %v38, 0
  %v147 = vsel %vm106, %v39, 0
  %v150 = vsel %vm106, %v40, 0
  %v153 = vsel %vm106, %v41, 0
  %v156 = vsel %vm106, %v42, 0
  %v159 = vsel %vm106, %v43, 0
  %v162 = vsel %vm106, %v44, 0
  %v165 = vsel %vm106, %v45, 0
  %v168 = vsel %vm106, %v46, 0
  %v171 = vsel %vm106, %v47, 0
  %v174 = vsel %vm106, %v48, 0
  %v177 = vsel %vm106, %v49, 0
  %179 = vmatprep.subr.mxu0 0.0
  %180 = vmatpush1.xpose.msra.mxu0 %v132
  %181 = vmatprep.subr.mxu0 0.0
  %182 = vmatpush1.xpose.msra.mxu0 %v135
  %183 = vmatprep.subr.mxu0 0.0
  %184 = vmatpush1.xpose.msra.mxu0 %v138
  %185 = vmatprep.subr.mxu0 0.0
  %186 = vmatpush1.xpose.msra.mxu0 %v141
  %187 = vmatprep.subr.mxu0 0.0
  %188 = vmatpush1.xpose.msra.mxu0 %v144
  %189 = vmatprep.subr.mxu0 0.0
  %190 = vmatpush1.xpose.msra.mxu0 %v147
  %191 = vmatprep.subr.mxu0 0.0
  %192 = vmatpush1.xpose.msra.mxu0 %v150
  %193 = vmatprep.subr.mxu0 0.0
  %194 = vmatpush1.xpose.msra.mxu0 %v153
  %195 = vmatprep.subr.mxu0 0.0
  %196 = vmatpush1.xpose.msra.mxu0 %v156
  %197 = vmatprep.subr.mxu0 0.0
  %198 = vmatpush1.xpose.msra.mxu0 %v159
  %199 = vmatprep.subr.mxu0 0.0
  %200 = vmatpush1.xpose.msra.mxu0 %v162
  %201 = vmatprep.subr.mxu0 0.0
  %202 = vmatpush1.xpose.msra.mxu0 %v165
  %203 = vmatprep.subr.mxu0 0.0
  %204 = vmatpush1.xpose.msra.mxu0 %v168
  %205 = vmatprep.subr.mxu0 0.0
  %206 = vmatpush1.xpose.msra.mxu0 %v171
  %207 = vmatprep.subr.mxu0 0.0
  %208 = vmatpush1.xpose.msra.mxu0 %v174
  %209 = vmatprep.subr.mxu0 0.0
  %210 = vmatpush1.xpose.msra.mxu0 %v177
  %211 = vmatprep.subr.mxu0 0.0
  %212 = vmatpush1.xpose.msra.mxu0 0.0
  %213 = vmatprep.subr.mxu0 0.0
  %214 = vmatpush1.xpose.msra.mxu0 0.0
  %215 = vmatprep.subr.mxu0 0.0
  %216 = vmatpush1.xpose.msra.mxu0 0.0
  %217 = vmatprep.subr.mxu0 0.0
  %218 = vmatpush1.xpose.msra.mxu0 0.0
  %219 = vmatprep.subr.mxu0 0.0
  %220 = vmatpush1.xpose.msra.mxu0 0.0
  %221 = vmatprep.subr.mxu0 0.0
  %222 = vmatpush1.xpose.msra.mxu0 0.0
  %223 = vmatprep.subr.mxu0 0.0
  %224 = vmatpush1.xpose.msra.mxu0 0.0
  %225 = vmatprep.subr.mxu0 0.0
  %226 = vmatpush1.xpose.msra.mxu0 0.0
  %227 = vmatprep.subr.mxu0 0.0
  %228 = vmatpush1.xpose.msra.mxu0 0.0
  %229 = vmatprep.subr.mxu0 0.0
  %230 = vmatpush1.xpose.msra.mxu0 0.0
  %231 = vmatprep.subr.mxu0 0.0
  %232 = vmatpush1.xpose.msra.mxu0 0.0
  %233 = vmatprep.subr.mxu0 0.0
  %234 = vmatpush1.xpose.msra.mxu0 0.0
  %235 = vmatprep.subr.mxu0 0.0
  %236 = vmatpush1.xpose.msra.mxu0 0.0
  %237 = vmatprep.subr.mxu0 0.0
  %238 = vmatpush1.xpose.msra.mxu0 0.0
  %239 = vmatprep.subr.mxu0 0.0
  %240 = vmatpush1.xpose.msra.mxu0 0.0
  %241 = vmatprep.subr.mxu0 0.0
  %242 = vmatpush1.xpose.msra.mxu0 0.0
  %243 = vmatprep.mubr.f32.mxu0 0.0
  %244 = vmatmul.mubr.f32.gmra.mrb[0].mxu0 %v108
  %v245 = vpop.f32.mrb[0].mxu0
  %v246 = vadd.f32 %v69, %v245
  %v247 = vpop.f32.mrb[0].mxu0
  %248 = vmatprep.mubr.f32.mxu0 0.0
  %249 = vmatmul.mubr.f32.gmra.mrb[0].mxu0 %v111
  %v250 = vpop.f32.mrb[0].mxu0
  %v251 = vadd.f32 %v74, %v250
  %v252 = vpop.f32.mrb[0].mxu0
  %253 = vmatprep.mubr.f32.mxu0 0.0
  %254 = vmatmul.mubr.f32.gmra.mrb[0].mxu0 %v114
  %v255 = vpop.f32.mrb[0].mxu0
  %v256 = vadd.f32 %v79, %v255
  %v257 = vpop.f32.mrb[0].mxu0
  %258 = vmatprep.mubr.f32.mxu0 0.0
  %259 = vmatmul.mubr.f32.gmra.mrb[0].mxu0 %v117
  %v260 = vpop.f32.mrb[0].mxu0
  %v261 = vadd.f32 %v84, %v260
  %v262 = vpop.f32.mrb[0].mxu0
  %263 = vmatprep.mubr.f32.mxu0 0.0
  %264 = vmatmul.mubr.f32.gmra.mrb[0].mxu0 %v120
  %v265 = vpop.f32.mrb[0].mxu0
  %v266 = vadd.f32 %v89, %v265
  %v267 = vpop.f32.mrb[0].mxu0
  %268 = vmatprep.mubr.f32.mxu0 0.0
  %269 = vmatmul.mubr.f32.gmra.mrb[0].mxu0 %v123
  %v270 = vpop.f32.mrb[0].mxu0
  %v271 = vadd.f32 %v94, %v270
  %v272 = vpop.f32.mrb[0].mxu0
  %273 = vmatprep.mubr.f32.mxu0 0.0
  %274 = vmatmul.mubr.f32.gmra.mrb[0].mxu0 %v126
  %v275 = vpop.f32.mrb[0].mxu0
  %v276 = vadd.f32 %v99, %v275
  %v277 = vpop.f32.mrb[0].mxu0
  %278 = vmatprep.mubr.f32.mxu0 0.0
  %279 = vmatmul.mubr.f32.gmra.mrb[0].mxu0 %v129
  %v280 = vpop.f32.mrb[0].mxu0
  %v281 = vadd.f32 %v104, %v280
  %v282 = vpop.f32.mrb[0].mxu0
  %283 = vdwg.mxu0
  %v284 = vtanh.pop %v246
  %v285 = vtanh.pop %v251
  %v286 = vtanh.pop %v256
  %v287 = vtanh.pop %v261
  %v288 = vtanh.pop %v266
  %v289 = vtanh.pop %v271
  %v290 = vtanh.pop %v276
  %v291 = vtanh.pop %v281
  %v292 = vld [vmem:[%s3] sm:$0xff]
  %v293 = vld [vmem:[%s3 + $0x8] sm:$0xff]
  %v294 = vld [vmem:[%s3 + $0x10] sm:$0xff]
  %v295 = vld [vmem:[%s3 + $0x18] sm:$0xff]
  %v296 = vld [vmem:[%s3 + $0x20] sm:$0xff]
  %v297 = vld [vmem:[%s3 + $0x28] sm:$0xff]
  %v298 = vld [vmem:[%s3 + $0x30] sm:$0xff]
  %v299 = vld [vmem:[%s3 + $0x38] sm:$0xff]
  %v300 = vld [vmem:[%s4] sm:$0xff]
  %v301 = vld [vmem:[%s4 + $0x8] sm:$0xff]
  %v302 = vld [vmem:[%s4 + $0x10] sm:$0xff]
  %v303 = vld [vmem:[%s4 + $0x18] sm:$0xff]
  %v304 = vld [vmem:[%s4 + $0x20] sm:$0xff]
  %v305 = vld [vmem:[%s4 + $0x28] sm:$0xff]
  %v306 = vld [vmem:[%s4 + $0x30] sm:$0xff]
  %v307 = vld [vmem:[%s4 + $0x38] sm:$0xff]
  %309 = vset.pattern.permute.xlu0 0
  %310 = vperm.xlu0 %309, %v300
  %v311 = vpop.permute.xlu0 %310
  %314 = vset.pattern.permute.xlu0 0
  %315 = vperm.xlu0 %314, %v301
  %v316 = vpop.permute.xlu0 %315
  %319 = vset.pattern.permute.xlu0 0
  %320 = vperm.xlu0 %319, %v302
  %v321 = vpop.permute.xlu0 %320
  %324 = vset.pattern.permute.xlu0 0
  %325 = vperm.xlu0 %324, %v303
  %v326 = vpop.permute.xlu0 %325
  %329 = vset.pattern.permute.xlu0 0
  %330 = vperm.xlu0 %329, %v304
  %v331 = vpop.permute.xlu0 %330
  %334 = vset.pattern.permute.xlu0 0
  %335 = vperm.xlu0 %334, %v305
  %v336 = vpop.permute.xlu0 %335
  %339 = vset.pattern.permute.xlu0 0
  %340 = vperm.xlu0 %339, %v306
  %v341 = vpop.permute.xlu0 %340
  %344 = vset.pattern.permute.xlu0 0
  %345 = vperm.xlu0 %344, %v307
  %v346 = vpop.permute.xlu0 %345
  %vm348 = vcmask 523264
  %v350 = vsel %vm348, %v292, 0
  %v353 = vsel %vm348, %v293, 0
  %v356 = vsel %vm348, %v294, 0
  %v359 = vsel %vm348, %v295, 0
  %v362 = vsel %vm348, %v296, 0
  %v365 = vsel %vm348, %v297, 0
  %v368 = vsel %vm348, %v298, 0
  %v371 = vsel %vm348, %v299, 0
  %373 = vmatprep.subr.mxu0 0.0
  %374 = vmatpush1.msra.mxu0 %v284
  %375 = vmatprep.subr.mxu0 0.0
  %376 = vmatpush1.msra.mxu0 %v285
  %377 = vmatprep.subr.mxu0 0.0
  %378 = vmatpush1.msra.mxu0 %v286
  %379 = vmatprep.subr.mxu0 0.0
  %380 = vmatpush1.msra.mxu0 %v287
  %381 = vmatprep.subr.mxu0 0.0
  %382 = vmatpush1.msra.mxu0 %v288
  %383 = vmatprep.subr.mxu0 0.0
  %384 = vmatpush1.msra.mxu0 %v289
  %385 = vmatprep.subr.mxu0 0.0
  %386 = vmatpush1.msra.mxu0 %v290
  %387 = vmatprep.subr.mxu0 0.0
  %388 = vmatpush1.msra.mxu0 %v291
  %389 = vmatprep.subr.mxu0 0.0
  %390 = vmatpush1.msra.mxu0 0.0
  %391 = vmatprep.subr.mxu0 0.0
  %392 = vmatpush1.msra.mxu0 0.0
  %393 = vmatprep.subr.mxu0 0.0
  %394 = vmatpush1.msra.mxu0 0.0
  %395 = vmatprep.subr.mxu0 0.0
  %396 = vmatpush1.msra.mxu0 0.0
  %397 = vmatprep.subr.mxu0 0.0
  %398 = vmatpush1.msra.mxu0 0.0
  %399 = vmatprep.subr.mxu0 0.0
  %400 = vmatpush1.msra.mxu0 0.0
  %401 = vmatprep.subr.mxu0 0.0
  %402 = vmatpush1.msra.mxu0 0.0
  %403 = vmatprep.subr.mxu0 0.0
  %404 = vmatpush1.msra.mxu0 0.0
  %405 = vmatprep.subr.mxu0 0.0
  %406 = vmatpush1.msra.mxu0 0.0
  %407 = vmatprep.subr.mxu0 0.0
  %408 = vmatpush1.msra.mxu0 0.0
  %409 = vmatprep.subr.mxu0 0.0
  %410 = vmatpush1.msra.mxu0 0.0
  %411 = vmatprep.subr.mxu0 0.0
  %412 = vmatpush1.msra.mxu0 0.0
  %413 = vmatprep.subr.mxu0 0.0
  %414 = vmatpush1.msra.mxu0 0.0
  %415 = vmatprep.subr.mxu0 0.0
  %416 = vmatpush1.msra.mxu0 0.0
  %417 = vmatprep.subr.mxu0 0.0
  %418 = vmatpush1.msra.mxu0 0.0
  %419 = vmatprep.subr.mxu0 0.0
  %420 = vmatpush1.msra.mxu0 0.0
  %421 = vmatprep.subr.mxu0 0.0
  %422 = vmatpush1.msra.mxu0 0.0
  %423 = vmatprep.subr.mxu0 0.0
  %424 = vmatpush1.msra.mxu0 0.0
  %425 = vmatprep.subr.mxu0 0.0
  %426 = vmatpush1.msra.mxu0 0.0
  %427 = vmatprep.subr.mxu0 0.0
  %428 = vmatpush1.msra.mxu0 0.0
  %429 = vmatprep.subr.mxu0 0.0
  %430 = vmatpush1.msra.mxu0 0.0
  %431 = vmatprep.subr.mxu0 0.0
  %432 = vmatpush1.msra.mxu0 0.0
  %433 = vmatprep.subr.mxu0 0.0
  %434 = vmatpush1.msra.mxu0 0.0
  %435 = vmatprep.subr.mxu0 0.0
  %436 = vmatpush1.msra.mxu0 0.0
  %437 = vmatprep.mubr.f32.mxu0 0.0
  %438 = vmatmul.mubr.f32.gmra.mrb[0].mxu0 %v350
  %v439 = vpop.f32.mrb[0].mxu0
  %v440 = vadd.f32 %v311, %v439
  %v441 = vpop.f32.mrb[0].mxu0
  %442 = vmatprep.mubr.f32.mxu0 0.0
  %443 = vmatmul.mubr.f32.gmra.mrb[0].mxu0 %v353
  %v444 = vpop.f32.mrb[0].mxu0
  %v445 = vadd.f32 %v316, %v444
  %v446 = vpop.f32.mrb[0].mxu0
  %447 = vmatprep.mubr.f32.mxu0 0.0
  %448 = vmatmul.mubr.f32.gmra.mrb[0].mxu0 %v356
  %v449 = vpop.f32.mrb[0].mxu0
  %v450 = vadd.f32 %v321, %v449
  %v451 = vpop.f32.mrb[0].mxu0
  %452 = vmatprep.mubr.f32.mxu0 0.0
  %453 = vmatmul.mubr.f32.gmra.mrb[0].mxu0 %v359
  %v454 = vpop.f32.mrb[0].mxu0
  %v455 = vadd.f32 %v326, %v454
  %v456 = vpop.f32.mrb[0].mxu0
  %457 = vmatprep.mubr.f32.mxu0 0.0
  %458 = vmatmul.mubr.f32.gmra.mrb[0].mxu0 %v362
  %v459 = vpop.f32.mrb[0].mxu0
  %v460 = vadd.f32 %v331, %v459
  %v461 = vpop.f32.mrb[0].mxu0
  %462 = vmatprep.mubr.f32.mxu0 0.0
  %463 = vmatmul.mubr.f32.gmra.mrb[0].mxu0 %v365
  %v464 = vpop.f32.mrb[0].mxu0
  %v465 = vadd.f32 %v336, %v464
  %v466 = vpop.f32.mrb[0].mxu0
  %467 = vmatprep.mubr.f32.mxu0 0.0
  %468 = vmatmul.mubr.f32.gmra.mrb[0].mxu0 %v368
  %v469 = vpop.f32.mrb[0].mxu0
  %v470 = vadd.f32 %v341, %v469
  %v471 = vpop.f32.mrb[0].mxu0
  %472 = vmatprep.mubr.f32.mxu0 0.0
  %473 = vmatmul.mubr.f32.gmra.mrb[0].mxu0 %v371
  %v474 = vpop.f32.mrb[0].mxu0
  %v475 = vadd.f32 %v346, %v474
  %v476 = vpop.f32.mrb[0].mxu0
  %477 = vdwg.mxu0
  %v478 = vtanh.pop %v440
  %v479 = vtanh.pop %v445
  %v480 = vtanh.pop %v450
  %v481 = vtanh.pop %v455
  %v482 = vtanh.pop %v460
  %v483 = vtanh.pop %v465
  %v484 = vtanh.pop %v470
  %v485 = vtanh.pop %v475
  %v486 = vld [vmem:[%s5] sm:$0xff]
  %v487 = vld [vmem:[%s5 + $0x8] sm:$0xff]
  %v488 = vld [vmem:[%s5 + $0x10] sm:$0xff]
  %v489 = vld [vmem:[%s5 + $0x18] sm:$0xff]
  %v490 = vld [vmem:[%s6] sm:$0xff]
  %v491 = vld [vmem:[%s6 + $0x8] sm:$0xff]
  %v492 = vld [vmem:[%s6 + $0x10] sm:$0xff]
  %v493 = vld [vmem:[%s6 + $0x18] sm:$0xff]
  %495 = vset.pattern.permute.xlu0 0
  %496 = vperm.xlu0 %495, %v490
  %v497 = vpop.permute.xlu0 %496
  %500 = vset.pattern.permute.xlu0 0
  %501 = vperm.xlu0 %500, %v491
  %v502 = vpop.permute.xlu0 %501
  %505 = vset.pattern.permute.xlu0 0
  %506 = vperm.xlu0 %505, %v492
  %v507 = vpop.permute.xlu0 %506
  %510 = vset.pattern.permute.xlu0 0
  %511 = vperm.xlu0 %510, %v493
  %v512 = vpop.permute.xlu0 %511
  %v515 = vsel %vm348, %v486, 0
  %v518 = vsel %vm348, %v487, 0
  %v521 = vsel %vm348, %v488, 0
  %v524 = vsel %vm348, %v489, 0
  %526 = vmatprep.subr.mxu0 0.0
  %527 = vmatpush1.msra.mxu0 %v478
  %528 = vmatprep.subr.mxu0 0.0
  %529 = vmatpush1.msra.mxu0 %v479
  %530 = vmatprep.subr.mxu0 0.0
  %531 = vmatpush1.msra.mxu0 %v480
  %532 = vmatprep.subr.mxu0 0.0
  %533 = vmatpush1.msra.mxu0 %v481
  %534 = vmatprep.subr.mxu0 0.0
  %535 = vmatpush1.msra.mxu0 %v482
  %536 = vmatprep.subr.mxu0 0.0
  %537 = vmatpush1.msra.mxu0 %v483
  %538 = vmatprep.subr.mxu0 0.0
  %539 = vmatpush1.msra.mxu0 %v484
  %540 = vmatprep.subr.mxu0 0.0
  %541 = vmatpush1.msra.mxu0 %v485
  %542 = vmatprep.subr.mxu0 0.0
  %543 = vmatpush1.msra.mxu0 0.0
  %544 = vmatprep.subr.mxu0 0.0
  %545 = vmatpush1.msra.mxu0 0.0
  %546 = vmatprep.subr.mxu0 0.0
  %547 = vmatpush1.msra.mxu0 0.0
  %548 = vmatprep.subr.mxu0 0.0
  %549 = vmatpush1.msra.mxu0 0.0
  %550 = vmatprep.subr.mxu0 0.0
  %551 = vmatpush1.msra.mxu0 0.0
  %552 = vmatprep.subr.mxu0 0.0
  %553 = vmatpush1.msra.mxu0 0.0
  %554 = vmatprep.subr.mxu0 0.0
  %555 = vmatpush1.msra.mxu0 0.0
  %556 = vmatprep.subr.mxu0 0.0
  %557 = vmatpush1.msra.mxu0 0.0
  %558 = vmatprep.subr.mxu0 0.0
  %559 = vmatpush1.msra.mxu0 0.0
  %560 = vmatprep.subr.mxu0 0.0
  %561 = vmatpush1.msra.mxu0 0.0
  %562 = vmatprep.subr.mxu0 0.0
  %563 = vmatpush1.msra.mxu0 0.0
  %564 = vmatprep.subr.mxu0 0.0
  %565 = vmatpush1.msra.mxu0 0.0
  %566 = vmatprep.subr.mxu0 0.0
  %567 = vmatpush1.msra.mxu0 0.0
  %568 = vmatprep.subr.mxu0 0.0
  %569 = vmatpush1.msra.mxu0 0.0
  %570 = vmatprep.subr.mxu0 0.0
  %571 = vmatpush1.msra.mxu0 0.0
  %572 = vmatprep.subr.mxu0 0.0
  %573 = vmatpush1.msra.mxu0 0.0
  %574 = vmatprep.subr.mxu0 0.0
  %575 = vmatpush1.msra.mxu0 0.0
  %576 = vmatprep.subr.mxu0 0.0
  %577 = vmatpush1.msra.mxu0 0.0
  %578 = vmatprep.subr.mxu0 0.0
  %579 = vmatpush1.msra.mxu0 0.0
  %580 = vmatprep.subr.mxu0 0.0
  %581 = vmatpush1.msra.mxu0 0.0
  %582 = vmatprep.subr.mxu0 0.0
  %583 = vmatpush1.msra.mxu0 0.0
  %584 = vmatprep.subr.mxu0 0.0
  %585 = vmatpush1.msra.mxu0 0.0
  %586 = vmatprep.subr.mxu0 0.0
  %587 = vmatpush1.msra.mxu0 0.0
  %588 = vmatprep.subr.mxu0 0.0
  %589 = vmatpush1.msra.mxu0 0.0
  %590 = vmatprep.mubr.f32.mxu0 0.0
  %591 = vmatmul.mubr.f32.gmra.mrb[0].mxu0 %v515
  %v592 = vpop.f32.mrb[0].mxu0
  %v593 = vadd.f32 %v497, %v592
  %v594 = vpop.f32.mrb[0].mxu0
  %595 = vmatprep.mubr.f32.mxu0 0.0
  %596 = vmatmul.mubr.f32.gmra.mrb[0].mxu0 %v518
  %v597 = vpop.f32.mrb[0].mxu0
  %v598 = vadd.f32 %v502, %v597
  %v599 = vpop.f32.mrb[0].mxu0
  %600 = vmatprep.mubr.f32.mxu0 0.0
  %601 = vmatmul.mubr.f32.gmra.mrb[0].mxu0 %v521
  %v602 = vpop.f32.mrb[0].mxu0
  %v603 = vadd.f32 %v507, %v602
  %v604 = vpop.f32.mrb[0].mxu0
  %605 = vmatprep.mubr.f32.mxu0 0.0
  %606 = vmatmul.mubr.f32.gmra.mrb[0].mxu0 %v524
  %v607 = vpop.f32.mrb[0].mxu0
  %v608 = vadd.f32 %v512, %v607
  %v609 = vpop.f32.mrb[0].mxu0
  %610 = vdwg.mxu0
  %v611 = vtanh.pop %v593
  %v612 = vtanh.pop %v598
  %v613 = vtanh.pop %v603
  %v614 = vtanh.pop %v608
  %v615 = vld [vmem:[%s7] sm:$0x1]
  %616 = vxpose.xlu0.b32.start [1/16] %v615, 128
  %617 = vxpose.xlu0.b32.cont [2/16] 0.0, 128
  %618 = vxpose.xlu0.b32.cont [3/16] 0.0, 128
  %619 = vxpose.xlu0.b32.cont [4/16] 0.0, 128
  %620 = vxpose.xlu0.b32.cont [5/16] 0.0, 128
  %621 = vxpose.xlu0.b32.cont [6/16] 0.0, 128
  %622 = vxpose.xlu0.b32.cont [7/16] 0.0, 128
  %623 = vxpose.xlu0.b32.cont [8/16] 0.0, 128
  %624 = vxpose.xlu0.b32.cont [9/16] 0.0, 128
  %625 = vxpose.xlu0.b32.cont [10/16] 0.0, 128
  %626 = vxpose.xlu0.b32.cont [11/16] 0.0, 128
  %627 = vxpose.xlu0.b32.cont [12/16] 0.0, 128
  %628 = vxpose.xlu0.b32.cont [13/16] 0.0, 128
  %629 = vxpose.xlu0.b32.cont [14/16] 0.0, 128
  %630 = vxpose.xlu0.b32.cont [15/16] 0.0, 128
  %631 = vxpose.xlu0.b32.end [16/16] 0.0, 128
  %v632 = vpop.trf.xlu0
  %v633 = vpop.trf.xlu0
  %v634 = vpop.trf.xlu0
  %v635 = vpop.trf.xlu0
  %v636 = vpop.trf.xlu0
  %v637 = vpop.trf.xlu0
  %v638 = vpop.trf.xlu0
  %v639 = vpop.trf.xlu0
  %v640 = vpop.trf.xlu0
  %v641 = vpop.trf.xlu0
  %v642 = vpop.trf.xlu0
  %v643 = vpop.trf.xlu0
  %v644 = vpop.trf.xlu0
  %v645 = vpop.trf.xlu0
  %v646 = vpop.trf.xlu0
  %v647 = vpop.trf.xlu0
  %649 = vset.pattern.permute.xlu0 0
  %650 = vperm.xlu0 %649, %v632
  %v651 = vpop.permute.xlu0 %650
  %654 = vset.pattern.permute.xlu0 0
  %655 = vperm.xlu0 %654, %v633
  %v656 = vpop.permute.xlu0 %655
  %659 = vset.pattern.permute.xlu0 0
  %660 = vperm.xlu0 %659, %v634
  %v661 = vpop.permute.xlu0 %660
  %664 = vset.pattern.permute.xlu0 0
  %665 = vperm.xlu0 %664, %v635
  %v666 = vpop.permute.xlu0 %665
  %v668 = vmul.f32 %v651, %v611
  %v669 = vmul.f32 %v656, %v612
  %v670 = vmul.f32 %v661, %v613
  %v671 = vmul.f32 %v666, %v614
  %v672 = vadd.f32 %v668, %v669
  %v673 = vadd.f32 %v672, %v670
  %v674 = vadd.f32 %v673, %v671
  %v675 = vrot.slane %v674, 4
  %v676 = vadd.f32 %v674, %v675
  %v677 = vrot.slane %v676, 2
  %v678 = vadd.f32 %v676, %v677
  %v679 = vrot.slane %v678, 1
  %v680 = vadd.f32 %v678, %v679
  %v681 = vld [vmem:[#allocation2] sm:$0x1]
  %683 = vset.pattern.permute.xlu0 0
  %684 = vperm.xlu0 %683, %v681
  %v685 = vpop.permute.xlu0 %684
  %v687 = vlaneseq
  %v688 = vshrl.u32 %v687, 7
  %v689 = vsub.s32 0, %v688
  %v690 = vrot.slane %v685, %v689
  %v691 = vadd.f32 %v680, %v690
  %692 = vst [vmem:[%s9] sm:$0x1] %v691
  // Predicated region
  $region38: #{td_network_forward.1} parent=0 // pred_check
    _
  $region39: #{td_network_forward.1} parent=0 // pred_check_branch
    %694 = sbr.rel (0) target = $region41
  $region40: #{td_network_forward.1} parent=0 // pred_region
    _
  $region41: #{td_network_forward.1} parent=0 // pred_fallthru
    _
  // Predicated region
  $region42: #{td_network_forward.1} parent=0 // pred_check
    _
  $region43: #{td_network_forward.1} parent=0 // pred_check_branch
    %696 = sbr.rel (0) target = $region45
  $region44: #{td_network_forward.1} parent=0 // pred_region
    _
  $region45: #{td_network_forward.1} parent=0 // pred_fallthru
    _

</llo_original>
